<compile_context>
chip_gen: v7x
topology: tpu7x:2x2x1
jax: 0.10.0
libtpu: 0.0.40
codegen_flags: <defaults>
</compile_context>

<pallas_src>
import jax
import jax.numpy as jnp
import numpy as np
from jax.experimental import pallas as pl
from jax.experimental.pallas import tpu as pltpu

LANE = 128


# ----------------------------------------------------------------------------
# helpers
# ----------------------------------------------------------------------------
def _round_up(x, m):
    return (x + m - 1) // m * m


def _cdiv(a, b):
    return (a + b - 1) // b


def _pad2(a, rows, cols):
    return jnp.pad(a, ((0, rows - a.shape[0]), (0, cols - a.shape[1])))


def _resident_spec(block_shape, single_buffer):
    """BlockSpec for a grid-invariant (weight / bias) block.

    These blocks never change across grid steps, so double buffering only
    wastes VMEM; request a single pipeline buffer when Pallas supports it.
    """
    index_map = lambda i: (0, 0)
    if single_buffer and hasattr(pl, "Buffered"):
        return pl.BlockSpec(block_shape, index_map, pipeline_mode=pl.Buffered(1))
    return pl.BlockSpec(block_shape, index_map)


# ----------------------------------------------------------------------------
# Fused kernel: (folded generator+fc1) GEMM -> LeakyReLU -> fc2 GEMM
# ----------------------------------------------------------------------------
def fcnn_tl_kernel(x_ref, w01_ref, b01_ref, w2_ref, b2_ref, out_ref):
    # folded generator + fc1:  h = x @ (Wg @ W1) + (bg @ W1 + b1)    [tm, Hp]
    h = jnp.dot(x_ref[...].astype(jnp.bfloat16), w01_ref[...],
                preferred_element_type=jnp.float32) + b01_ref[...]
    # LeakyReLU(0.01): single max per element (0.01*h > h exactly when h < 0)
    h = jnp.maximum(h, 0.01 * h)
    # fc2: Linear(dim_hidden, dim_out)                               [tm, Op]
    out_ref[...] = (jnp.dot(h.astype(jnp.bfloat16), w2_ref[...],
                            preferred_element_type=jnp.float32)
                    + b2_ref[...]).astype(out_ref.dtype)


# ----------------------------------------------------------------------------
# Wrapper
# ----------------------------------------------------------------------------
def fcnn_tl_forward(x, w_gen, b_gen, w_fc1, b_fc1, w_fc2, b_fc2, *, block_rows=512):
    M, Din = x.shape
    H = w_fc1.shape[0]
    Dout = w_fc2.shape[1]

    Hp = _round_up(H, LANE)   # lane-align only the small weight matrices
    Op = _round_up(Dout, LANE)

    # --- fold generator + fc1 (both linear, pre-nonlinearity) in f32 ---------
    f32 = jnp.float32
    w01 = jnp.dot(w_gen.astype(f32), w_fc1.astype(f32))                       # (Din, H)
    b01 = jnp.dot(b_gen.astype(f32).reshape(1, -1), w_fc1.astype(f32)) \
        + b_fc1.astype(f32).reshape(1, -1)                                    # (1, H)

    w01p = _pad2(w01.astype(jnp.bfloat16), Din, Hp)          # (Din, Hp) bf16
    w2p = _pad2(w_fc2.astype(jnp.bfloat16), Hp, Op)          # (Hp, Op)  bf16
    b01p = _pad2(b01, 1, Hp)                                  # (1, Hp)   f32
    b2p = _pad2(b_fc2.astype(f32).reshape(1, -1), 1, Op)      # (1, Op)   f32

    # --- row tiling (no wrapper-side cast/pad of x; ragged last tile OK) -----
    tm = min(_round_up(block_rows, 8), _round_up(M, 8))
    n_tiles = _cdiv(M, tm)
    if M >= 16 and n_tiles % 2 == 1:
        # v7x has 2 TensorCores and the row axis is "parallel": prefer an even
        # (and >= 2) number of row tiles so both cores get work.
        tm = _round_up(_cdiv(M, n_tiles + 1), 8)
        n_tiles = _cdiv(M, tm)

    # CostEstimate from the unpadded logical dims.
    flops = 2 * M * (Din * H + H * Dout)
    bytes_accessed = (M * Din * 4 + Din * H * 2 + H * Dout * 2
                      + H * 4 + Dout * 4 + M * Dout * 4)

    def run(single_buffer):
        return pl.pallas_call(
            fcnn_tl_kernel,
            out_shape=jax.ShapeDtypeStruct((M, Op), jnp.float32),
            grid_spec=pltpu.PrefetchScalarGridSpec(
                num_scalar_prefetch=0,
                grid=(n_tiles,),
                in_specs=[
                    pl.BlockSpec((tm, Din), lambda i: (i, 0)),   # x row tile (pipelined)
                    _resident_spec((Din, Hp), single_buffer),    # folded gen+fc1 weight
                    _resident_spec((1, Hp), single_buffer),      # folded bias
                    _resident_spec((Hp, Op), single_buffer),     # fc2 weight
                    _resident_spec((1, Op), single_buffer),      # fc2 bias
                ],
                out_specs=pl.BlockSpec((tm, Op), lambda i: (i, 0)),
            ),
            compiler_params=pltpu.CompilerParams(
                dimension_semantics=("parallel",),               # shard rows across TCs (v7x)
                vmem_limit_bytes=32 * 1024 * 1024,               # explicit; v5e default is 16 MiB
            ),
            cost_estimate=pl.CostEstimate(
                flops=flops, transcendentals=0, bytes_accessed=bytes_accessed),
        )(x, w01p, b01p, w2p, b2p)

    try:
        out = run(single_buffer=True)
    except Exception:
        # Fallback for Pallas builds without BlockSpec pipeline_mode / pl.Buffered.
        out = run(single_buffer=False)

    return out[:, :Dout]


# ----------------------------------------------------------------------------
# Plain-JAX f32 reference mirroring the PyTorch module's semantics
# ----------------------------------------------------------------------------
def reference_forward(x, w_gen, b_gen, w_fc1, b_fc1, w_fc2, b_fc2):
    h = jnp.dot(x, w_gen) + b_gen                       # generator stand-in
    h = jnp.dot(h, w_fc1) + b_fc1                       # fc1
    h = jnp.where(h >= 0.0, h, 0.01 * h)                # leaky_relu (slope 0.01)
    return jnp.dot(h, w_fc2) + b_fc2                    # fc2


# ----------------------------------------------------------------------------
if __name__ == "__main__":
    # small deterministic example: batch=200, dim_in=16, dim_hidden=32, dim_out=8
    M, Din, H, Dout = 200, 16, 32, 8

    key = jax.random.PRNGKey(0)
    k_x, k_wg, k_bg, k_w1, k_b1, k_w2, k_b2 = jax.random.split(key, 7)

    x = jax.random.normal(k_x, (M, Din), jnp.float32)
    w_gen = jax.random.normal(k_wg, (Din, H), jnp.float32) * 0.1
    b_gen = jax.random.normal(k_bg, (H,), jnp.float32) * 0.1
    w_fc1 = jax.random.normal(k_w1, (H, H), jnp.float32) * 0.1
    b_fc1 = jax.random.normal(k_b1, (H,), jnp.float32) * 0.1
    w_fc2 = jax.random.normal(k_w2, (H, Dout), jnp.float32) * 0.1
    b_fc2 = jax.random.normal(k_b2, (Dout,), jnp.float32) * 0.1

    out = fcnn_tl_forward(x, w_gen, b_gen, w_fc1, b_fc1, w_fc2, b_fc2)
    out = jax.block_until_ready(out)

    ref = reference_forward(x, w_gen, b_gen, w_fc1, b_fc1, w_fc2, b_fc2)
    np.testing.assert_allclose(np.asarray(out), np.asarray(ref),
                               rtol=2e-2, atol=2e-2)

    print("KERNEL_OK")
</pallas_src>

<mosaic_0001>
module attributes {stable_mosaic.version = 11 : i64} {
  func.func @fcnn_tl_kernel(%arg0: i32, %arg1: memref<104x16xf32, #tpu.memory_space<vmem>>, %arg2: memref<16x128xbf16, #tpu.memory_space<vmem>>, %arg3: memref<1x128xf32, #tpu.memory_space<vmem>>, %arg4: memref<128x128xbf16, #tpu.memory_space<vmem>>, %arg5: memref<1x128xf32, #tpu.memory_space<vmem>>, %arg6: memref<104x128xf32, #tpu.memory_space<vmem>>) attributes {dimension_semantics = [#tpu.dimension_semantics<parallel>], iteration_bounds = array<i64: 2>, scalar_prefetch = 0 : i64, scratch_operands = 0 : i64, tpu.core_type = #tpu.core_type<tc>, window_params = [{transform_indices = @transform_0, window_bounds = array<i64: 104, 16>}, {pipeline_mode = #tpu.pipeline_mode<synchronous>, transform_indices = @transform_1, window_bounds = array<i64: 16, 128>}, {pipeline_mode = #tpu.pipeline_mode<synchronous>, transform_indices = @transform_2, window_bounds = array<i64: 1, 128>}, {pipeline_mode = #tpu.pipeline_mode<synchronous>, transform_indices = @transform_3, window_bounds = array<i64: 128, 128>}, {pipeline_mode = #tpu.pipeline_mode<synchronous>, transform_indices = @transform_4, window_bounds = array<i64: 1, 128>}, {transform_indices = @transform_5, window_bounds = array<i64: 104, 128>}]} {
    %c0 = arith.constant 0 : index
    %c0_0 = arith.constant 0 : index
    %0 = vector.load %arg1[%c0, %c0_0] : memref<104x16xf32, #tpu.memory_space<vmem>>, vector<104x16xf32>
    %1 = arith.truncf %0 : vector<104x16xf32> to vector<104x16xbf16>
    %c0_1 = arith.constant 0 : index
    %c0_2 = arith.constant 0 : index
    %2 = vector.load %arg2[%c0_1, %c0_2] : memref<16x128xbf16, #tpu.memory_space<vmem>>, vector<16x128xbf16>
    %cst = arith.constant dense<0.000000e+00> : vector<104x128xf32>
    %3 = tpu.matmul %1, %2, %cst {dimension_numbers = #tpu.dot_dimension_numbers<[1], [0], [0], [1], [0, 0, 1, 1], [], []>} : vector<104x16xbf16>, vector<16x128xbf16>, vector<104x128xf32> -> vector<104x128xf32>
    %c0_3 = arith.constant 0 : index
    %c0_4 = arith.constant 0 : index
    %4 = vector.load %arg3[%c0_3, %c0_4] : memref<1x128xf32, #tpu.memory_space<vmem>>, vector<1x128xf32>
    %5 = vector.broadcast %4 : vector<1x128xf32> to vector<104x128xf32>
    %6 = arith.addf %3, %5 : vector<104x128xf32>
    %cst_5 = arith.constant 0.00999999977 : f32
    %7 = vector.broadcast %cst_5 : f32 to vector<104x128xf32>
    %8 = arith.mulf %7, %6 : vector<104x128xf32>
    %9 = arith.maximumf %6, %8 : vector<104x128xf32>
    %10 = arith.truncf %9 : vector<104x128xf32> to vector<104x128xbf16>
    %c0_6 = arith.constant 0 : index
    %c0_7 = arith.constant 0 : index
    %11 = vector.load %arg4[%c0_6, %c0_7] : memref<128x128xbf16, #tpu.memory_space<vmem>>, vector<128x128xbf16>
    %cst_8 = arith.constant dense<0.000000e+00> : vector<104x128xf32>
    %12 = tpu.matmul %10, %11, %cst_8 {dimension_numbers = #tpu.dot_dimension_numbers<[1], [0], [0], [1], [0, 0, 1, 1], [], []>} : vector<104x128xbf16>, vector<128x128xbf16>, vector<104x128xf32> -> vector<104x128xf32>
    %c0_9 = arith.constant 0 : index
    %c0_10 = arith.constant 0 : index
    %13 = vector.load %arg5[%c0_9, %c0_10] : memref<1x128xf32, #tpu.memory_space<vmem>>, vector<1x128xf32>
    %14 = vector.broadcast %13 : vector<1x128xf32> to vector<104x128xf32>
    %15 = arith.addf %12, %14 : vector<104x128xf32>
    %c0_11 = arith.constant 0 : index
    %c0_12 = arith.constant 0 : index
    %16 = vector.load %arg6[%c0_11, %c0_12] : memref<104x128xf32, #tpu.memory_space<vmem>>, vector<104x128xf32>
    tpu.vector_store %arg6[%c0_11, %c0_12], %15 {strides = array<i32>} : memref<104x128xf32, #tpu.memory_space<vmem>>, vector<104x128xf32>,
    return
  }
  func.func @transform_0(%arg0: i32) -> (i32, i32) {
    %c0_i32 = arith.constant 0 : i32
    %c0_i32_0 = arith.constant 0 : i32
    return %arg0, %c0_i32 : i32, i32
  }
  func.func @transform_1(%arg0: i32) -> (i32, i32) {
    %c0_i32 = arith.constant 0 : i32
    %c0_i32_0 = arith.constant 0 : i32
    %c0_i32_1 = arith.constant 0 : i32
    return %c0_i32, %c0_i32_0 : i32, i32
  }
  func.func @transform_2(%arg0: i32) -> (i32, i32) {
    %c0_i32 = arith.constant 0 : i32
    %c0_i32_0 = arith.constant 0 : i32
    %c0_i32_1 = arith.constant 0 : i32
    return %c0_i32, %c0_i32_0 : i32, i32
  }
  func.func @transform_3(%arg0: i32) -> (i32, i32) {
    %c0_i32 = arith.constant 0 : i32
    %c0_i32_0 = arith.constant 0 : i32
    %c0_i32_1 = arith.constant 0 : i32
    return %c0_i32, %c0_i32_0 : i32, i32
  }
  func.func @transform_4(%arg0: i32) -> (i32, i32) {
    %c0_i32 = arith.constant 0 : i32
    %c0_i32_0 = arith.constant 0 : i32
    %c0_i32_1 = arith.constant 0 : i32
    return %c0_i32, %c0_i32_0 : i32, i32
  }
  func.func @transform_5(%arg0: i32) -> (i32, i32) {
    %c0_i32 = arith.constant 0 : i32
    %c0_i32_0 = arith.constant 0 : i32
    return %arg0, %c0_i32 : i32, i32
  }
}

module attributes {stable_mosaic.version = 11 : i64} {
  func.func @fcnn_tl_kernel(%arg0: i32, %arg1: memref<104x16xf32, #tpu.memory_space<vmem>>, %arg2: memref<16x128xbf16, #tpu.memory_space<vmem>>, %arg3: memref<1x128xf32, #tpu.memory_space<vmem>>, %arg4: memref<128x128xbf16, #tpu.memory_space<vmem>>, %arg5: memref<1x128xf32, #tpu.memory_space<vmem>>, %arg6: memref<104x128xf32, #tpu.memory_space<vmem>>) attributes {dimension_semantics = [#tpu.dimension_semantics<parallel>], iteration_bounds = array<i64: 2>, scalar_prefetch = 0 : i64, scratch_operands = 0 : i64, tpu.core_type = #tpu.core_type<tc>, window_params = [{transform_indices = @transform_0, window_bounds = array<i64: 104, 16>}, {pipeline_mode = #tpu.pipeline_mode<synchronous>, transform_indices = @transform_1, window_bounds = array<i64: 16, 128>}, {pipeline_mode = #tpu.pipeline_mode<synchronous>, transform_indices = @transform_2, window_bounds = array<i64: 1, 128>}, {pipeline_mode = #tpu.pipeline_mode<synchronous>, transform_indices = @transform_3, window_bounds = array<i64: 128, 128>}, {pipeline_mode = #tpu.pipeline_mode<synchronous>, transform_indices = @transform_4, window_bounds = array<i64: 1, 128>}, {transform_indices = @transform_5, window_bounds = array<i64: 104, 128>}]} {
    %c0 = arith.constant 0 : index
    %c0_0 = arith.constant 0 : index
    %0 = vector.load %arg1[%c0, %c0_0] : memref<104x16xf32, #tpu.memory_space<vmem>>, vector<104x16xf32>
    %1 = arith.truncf %0 : vector<104x16xf32> to vector<104x16xbf16>
    %c0_1 = arith.constant 0 : index
    %c0_2 = arith.constant 0 : index
    %2 = vector.load %arg2[%c0_1, %c0_2] : memref<16x128xbf16, #tpu.memory_space<vmem>>, vector<16x128xbf16>
    %cst = arith.constant dense<0.000000e+00> : vector<104x128xf32>
    %3 = tpu.matmul %1, %2, %cst {dimension_numbers = #tpu.dot_dimension_numbers<[1], [0], [0], [1], [0, 0, 1, 1], [], []>} : vector<104x16xbf16>, vector<16x128xbf16>, vector<104x128xf32> -> vector<104x128xf32>
    %c0_3 = arith.constant 0 : index
    %c0_4 = arith.constant 0 : index
    %4 = vector.load %arg3[%c0_3, %c0_4] : memref<1x128xf32, #tpu.memory_space<vmem>>, vector<1x128xf32>
    %5 = vector.broadcast %4 : vector<1x128xf32> to vector<104x128xf32>
    %6 = arith.addf %3, %5 : vector<104x128xf32>
    %cst_5 = arith.constant 0.00999999977 : f32
    %7 = vector.broadcast %cst_5 : f32 to vector<104x128xf32>
    %8 = arith.mulf %7, %6 : vector<104x128xf32>
    %9 = arith.maximumf %6, %8 : vector<104x128xf32>
    %10 = arith.truncf %9 : vector<104x128xf32> to vector<104x128xbf16>
    %c0_6 = arith.constant 0 : index
    %c0_7 = arith.constant 0 : index
    %11 = vector.load %arg4[%c0_6, %c0_7] : memref<128x128xbf16, #tpu.memory_space<vmem>>, vector<128x128xbf16>
    %cst_8 = arith.constant dense<0.000000e+00> : vector<104x128xf32>
    %12 = tpu.matmul %10, %11, %cst_8 {dimension_numbers = #tpu.dot_dimension_numbers<[1], [0], [0], [1], [0, 0, 1, 1], [], []>} : vector<104x128xbf16>, vector<128x128xbf16>, vector<104x128xf32> -> vector<104x128xf32>
    %c0_9 = arith.constant 0 : index
    %c0_10 = arith.constant 0 : index
    %13 = vector.load %arg5[%c0_9, %c0_10] : memref<1x128xf32, #tpu.memory_space<vmem>>, vector<1x128xf32>
    %14 = vector.broadcast %13 : vector<1x128xf32> to vector<104x128xf32>
    %15 = arith.addf %12, %14 : vector<104x128xf32>
    %c0_11 = arith.constant 0 : index
    %c0_12 = arith.constant 0 : index
    %16 = vector.load %arg6[%c0_11, %c0_12] : memref<104x128xf32, #tpu.memory_space<vmem>>, vector<104x128xf32>
    tpu.vector_store %arg6[%c0_11, %c0_12], %15 {strides = array<i32>} : memref<104x128xf32, #tpu.memory_space<vmem>>, vector<104x128xf32>,
    return
  }
  func.func @transform_0(%arg0: i32) -> (i32, i32) {
    %c0_i32 = arith.constant 0 : i32
    %c0_i32_0 = arith.constant 0 : i32
    return %arg0, %c0_i32 : i32, i32
  }
  func.func @transform_1(%arg0: i32) -> (i32, i32) {
    %c0_i32 = arith.constant 0 : i32
    %c0_i32_0 = arith.constant 0 : i32
    %c0_i32_1 = arith.constant 0 : i32
    return %c0_i32, %c0_i32_0 : i32, i32
  }
  func.func @transform_2(%arg0: i32) -> (i32, i32) {
    %c0_i32 = arith.constant 0 : i32
    %c0_i32_0 = arith.constant 0 : i32
    %c0_i32_1 = arith.constant 0 : i32
    return %c0_i32, %c0_i32_0 : i32, i32
  }
  func.func @transform_3(%arg0: i32) -> (i32, i32) {
    %c0_i32 = arith.constant 0 : i32
    %c0_i32_0 = arith.constant 0 : i32
    %c0_i32_1 = arith.constant 0 : i32
    return %c0_i32, %c0_i32_0 : i32, i32
  }
  func.func @transform_4(%arg0: i32) -> (i32, i32) {
    %c0_i32 = arith.constant 0 : i32
    %c0_i32_0 = arith.constant 0 : i32
    %c0_i32_1 = arith.constant 0 : i32
    return %c0_i32, %c0_i32_0 : i32, i32
  }
  func.func @transform_5(%arg0: i32) -> (i32, i32) {
    %c0_i32 = arith.constant 0 : i32
    %c0_i32_0 = arith.constant 0 : i32
    return %arg0, %c0_i32 : i32, i32
  }
}

</mosaic_0001>

<llo_original>
// kernel: tpu_custom_call.1
$region0: #{tpu_custom_call.1}
  #allocation0 [shape = 'u32[]', space=smem, size = 0x4, offset = 0x4, fixed_abs, tag = 'smem constant byte address 0x4 - core index']
  #allocation1 [shape = 'u32[144,128]{1,0:T(1,128)}', space=vmem, size = 0x12000, scoped, tag = 'internal scratch']
  %s0 = inlined_call_operand.vmem [shape: f32[200,16], index: 0, kind: input, shape index: {}]
  %s1 = inlined_call_operand.vmem [shape: bf16[16,128], index: 1, kind: input, shape index: {}]
  %s2 = inlined_call_operand.vmem [shape: f32[1,128], index: 2, kind: input, shape index: {}]
  %s3 = inlined_call_operand.vmem [shape: bf16[128,128], index: 3, kind: input, shape index: {}]
  %s4 = inlined_call_operand.vmem [shape: f32[1,128], index: 4, kind: input, shape index: {}]
  %s5 = inlined_call_operand.hbm [shape: f32[200,128], index: 5, kind: output, shape index: {}]
  %s6 = sld [smem:[#allocation0]]
  $region53: #{tpu_custom_call.1} parent=0
    _
  %s8 = ssub.s32 1, %s6
  %s9 = scalar_select 0, %s8, %s6
  $region1: #{tpu_custom_call.1} parent=0
    #allocation2 [shape = 'u8[106496]{0}', space=vmem, size = 0x1a000, scoped, tag = 'output window, operand 0']
    #allocation3 [shape = 's32[2]{0}', space=sflag, size = 0x8, scoped, tag = 'scoped memory for tpu_custom_call.1']
    %10 = vsyncpa [#allocation3], 0
    %s11 = scalar_lea.sflag [#allocation3], 1
    %12 = vsyncpa %s11, 0
    loop: start=0, step=1, limit=4
    $region2: #{tpu_custom_call.1} parent=1 // loop_pre_header
      _
    $region3: #{tpu_custom_call.1} parent=1 // loop_header
      %s14 = sphi 0, %s18
      %p15 = scmp.ge.s32.totalorder %s14, 4
      %s24 = sphi 0, %s26
      %s27 = sphi 0, %s24
      %s28 = sphi 0, %s27
      %s44 = sphi 0, %s28
      %s48 = sphi 0, %s48
      %s50 = sphi 0, %s48
      %s51 = sphi 0, %s50
      %s65 = sphi 0, %s51
      %s69 = sphi 0, %s69
      %s71 = sphi 0, %s69
      %s72 = sphi 0, %s71
      %s86 = sphi 0, %s72
      %s90 = sphi 0, %s90
      %s92 = sphi 0, %s90
      %s93 = sphi 0, %s92
      %s107 = sphi 0, %s93
      %s111 = sphi 0, %s111
      %s113 = sphi 0, %s111
      %s114 = sphi 0, %s113
      %s128 = sphi 0, %s114
      %s134 = sphi 0, %s136
      %s137 = sphi 0, %s134
      %s138 = sphi 0, %s137
      %s154 = sphi 0, %s138
    $region4: #{tpu_custom_call.1} parent=1 // loop_header_branch
      %17 = sbr.rel (%p15) target = $region8
    $region5: #{tpu_custom_call.1} parent=1 // loop_body
      %s19 = ssub.s32 %s14, 1
      %s20 = ssub.s32 %s14, 2
      %s21 = sadd.s32 %s14, 1
      %s22 = ssub.s32 %s14, %s21
      %p23 = scmp.eq.s32.totalorder %s22, 0
      %s25 = sadd.s32 %s24, 1
      %s26 = scalar_select %p23, %s24, %s25
      %p29 = pneg %p23
      %p30 = scmp.eq.s32.totalorder %s14, 1
      %p31 = por %p29, %p30
      %p32 = scmp.ne.s32.totalorder %s24, %s27
      %p33 = scmp.eq.s32.totalorder %s14, 0
      %p34 = por %p32, %p33
      %p35 = scmp.ne.s32.totalorder %s24, %s27
      %p36 = scmp.eq.s32.totalorder %s19, 1
      %p37 = por %p35, %p36
      %p38 = scmp.ne.s32.totalorder %s27, %s28
      %p39 = scmp.eq.s32.totalorder %s19, 0
      %p40 = por %p38, %p39
      %p41 = scmp.ne.s32.totalorder %s27, %s28
      %p42 = scmp.eq.s32.totalorder %s20, 1
      %p43 = por %p41, %p42
      %p45 = scmp.ne.s32.totalorder %s28, %s44
      %p46 = scmp.eq.s32.totalorder %s20, 0
      %p47 = por %p45, %p46
      %s49 = sadd.s32 %s48, 1
      %p52 = scmp.eq.s32.totalorder %s14, 1
      %p53 = scmp.ne.s32.totalorder %s48, %s50
      %p54 = scmp.eq.s32.totalorder %s14, 0
      %p55 = por %p53, %p54
      %p56 = scmp.ne.s32.totalorder %s48, %s50
      %p57 = scmp.eq.s32.totalorder %s19, 1
      %p58 = por %p56, %p57
      %p59 = scmp.ne.s32.totalorder %s50, %s51
      %p60 = scmp.eq.s32.totalorder %s19, 0
      %p61 = por %p59, %p60
      %p62 = scmp.ne.s32.totalorder %s50, %s51
      %p63 = scmp.eq.s32.totalorder %s20, 1
      %p64 = por %p62, %p63
      %p66 = scmp.ne.s32.totalorder %s51, %s65
      %p67 = scmp.eq.s32.totalorder %s20, 0
      %p68 = por %p66, %p67
      %s70 = sadd.s32 %s69, 1
      %p73 = scmp.eq.s32.totalorder %s14, 1
      %p74 = scmp.ne.s32.totalorder %s69, %s71
      %p75 = scmp.eq.s32.totalorder %s14, 0
      %p76 = por %p74, %p75
      %p77 = scmp.ne.s32.totalorder %s69, %s71
      %p78 = scmp.eq.s32.totalorder %s19, 1
      %p79 = por %p77, %p78
      %p80 = scmp.ne.s32.totalorder %s71, %s72
      %p81 = scmp.eq.s32.totalorder %s19, 0
      %p82 = por %p80, %p81
      %p83 = scmp.ne.s32.totalorder %s71, %s72
      %p84 = scmp.eq.s32.totalorder %s20, 1
      %p85 = por %p83, %p84
      %p87 = scmp.ne.s32.totalorder %s72, %s86
      %p88 = scmp.eq.s32.totalorder %s20, 0
      %p89 = por %p87, %p88
      %s91 = sadd.s32 %s90, 1
      %p94 = scmp.eq.s32.totalorder %s14, 1
      %p95 = scmp.ne.s32.totalorder %s90, %s92
      %p96 = scmp.eq.s32.totalorder %s14, 0
      %p97 = por %p95, %p96
      %p98 = scmp.ne.s32.totalorder %s90, %s92
      %p99 = scmp.eq.s32.totalorder %s19, 1
      %p100 = por %p98, %p99
      %p101 = scmp.ne.s32.totalorder %s92, %s93
      %p102 = scmp.eq.s32.totalorder %s19, 0
      %p103 = por %p101, %p102
      %p104 = scmp.ne.s32.totalorder %s92, %s93
      %p105 = scmp.eq.s32.totalorder %s20, 1
      %p106 = por %p104, %p105
      %p108 = scmp.ne.s32.totalorder %s93, %s107
      %p109 = scmp.eq.s32.totalorder %s20, 0
      %p110 = por %p108, %p109
      %s112 = sadd.s32 %s111, 1
      %p115 = scmp.eq.s32.totalorder %s14, 1
      %p116 = scmp.ne.s32.totalorder %s111, %s113
      %p117 = scmp.eq.s32.totalorder %s14, 0
      %p118 = por %p116, %p117
      %p119 = scmp.ne.s32.totalorder %s111, %s113
      %p120 = scmp.eq.s32.totalorder %s19, 1
      %p121 = por %p119, %p120
      %p122 = scmp.ne.s32.totalorder %s113, %s114
      %p123 = scmp.eq.s32.totalorder %s19, 0
      %p124 = por %p122, %p123
      %p125 = scmp.ne.s32.totalorder %s113, %s114
      %p126 = scmp.eq.s32.totalorder %s20, 1
      %p127 = por %p125, %p126
      %p129 = scmp.ne.s32.totalorder %s114, %s128
      %p130 = scmp.eq.s32.totalorder %s20, 0
      %p131 = por %p129, %p130
      %s132 = ssub.s32 %s14, %s21
      %p133 = scmp.eq.s32.totalorder %s132, 0
      %s135 = sadd.s32 %s134, 1
      %s136 = scalar_select %p133, %s134, %s135
      %p139 = pneg %p133
      %p140 = scmp.eq.s32.totalorder %s14, 1
      %p141 = por %p139, %p140
      %p142 = scmp.ne.s32.totalorder %s134, %s137
      %p143 = scmp.eq.s32.totalorder %s14, 0
      %p144 = por %p142, %p143
      %p145 = scmp.ne.s32.totalorder %s134, %s137
      %p146 = scmp.eq.s32.totalorder %s19, 1
      %p147 = por %p145, %p146
      %p148 = scmp.ne.s32.totalorder %s137, %s138
      %p149 = scmp.eq.s32.totalorder %s19, 0
      %p150 = por %p148, %p149
      %p151 = scmp.ne.s32.totalorder %s137, %s138
      %p152 = scmp.eq.s32.totalorder %s20, 1
      %p153 = por %p151, %p152
      %p155 = scmp.ne.s32.totalorder %s138, %s154
      %p156 = scmp.eq.s32.totalorder %s20, 0
      %p157 = por %p155, %p156
      %p158 = scmp.le.s32.totalorder 1, %s14
      %p159 = scmp.lt.s32.totalorder %s14, 3
      %p160 = pnand %p158, %p159
      %p161 = pneg %p160
      // Predicated region
      $region9: #{tpu_custom_call.1} parent=5 // pred_check
        _
      $region10: #{tpu_custom_call.1} parent=5 // pred_check_branch
        %163 = sbr.rel (%p160) target = $region12
      $region11: #{tpu_custom_call.1} parent=5 // pred_region
        %s164 = ssub.s32 %s14, 1
        // Predicated region
        $region13: #{tpu_custom_call.1} parent=11 // pred_check
          %p165 = pneg %p61
        $region14: #{tpu_custom_call.1} parent=11 // pred_check_branch
          %167 = sbr.rel (%p165) target = $region16
        $region15: #{tpu_custom_call.1} parent=11 // pred_region
          _
        $region16: #{tpu_custom_call.1} parent=11 // pred_fallthru
          _
        // Predicated region
        $region17: #{tpu_custom_call.1} parent=11 // pred_check
          %p168 = pneg %p82
        $region18: #{tpu_custom_call.1} parent=11 // pred_check_branch
          %170 = sbr.rel (%p168) target = $region20
        $region19: #{tpu_custom_call.1} parent=11 // pred_region
          _
        $region20: #{tpu_custom_call.1} parent=11 // pred_fallthru
          _
        // Predicated region
        $region21: #{tpu_custom_call.1} parent=11 // pred_check
          %p171 = pneg %p103
        $region22: #{tpu_custom_call.1} parent=11 // pred_check_branch
          %173 = sbr.rel (%p171) target = $region24
        $region23: #{tpu_custom_call.1} parent=11 // pred_region
          _
        $region24: #{tpu_custom_call.1} parent=11 // pred_fallthru
          _
        // Predicated region
        $region25: #{tpu_custom_call.1} parent=11 // pred_check
          %p174 = pneg %p124
        $region26: #{tpu_custom_call.1} parent=11 // pred_check_branch
          %176 = sbr.rel (%p174) target = $region28
        $region27: #{tpu_custom_call.1} parent=11 // pred_region
          _
        $region28: #{tpu_custom_call.1} parent=11 // pred_fallthru
          _
      $region12: #{tpu_custom_call.1} parent=5 // pred_fallthru
        _
      %p177 = scmp.lt.s32.totalorder %s14, 2
      // Predicated region
      $region29: #{tpu_custom_call.1} parent=5 // pred_check
        %p178 = pneg %p177
      $region30: #{tpu_custom_call.1} parent=5 // pred_check_branch
        %180 = sbr.rel (%p178) target = $region32
      $region31: #{tpu_custom_call.1} parent=5 // pred_region
        // Predicated region
        $region33: #{tpu_custom_call.1} parent=31 // pred_check
          %p181 = pneg %p34
        $region34: #{tpu_custom_call.1} parent=31 // pred_check_branch
          %183 = sbr.rel (%p181) target = $region36
        $region35: #{tpu_custom_call.1} parent=31 // pred_region
          %s184 = smul.u32 13, %s14
          %s185 = ssub.s32 25, %s184
          %p186 = scmp.lt.s32.totalorder %s185, 13
          %s187 = scalar_select %p186, %s185, 13
          %s188 = smul.u32 128, %s187
          %p189 = scmp.lt.s32.totalorder %s184, 24
          %s190 = scalar_select %p189, %s184, 24
          %s191 = smul.addr %s190, 8
          %s192 = scalar_lea.vmem %s0, %s191
          %s193 = smul.u32 13, %s14
          %s194 = ssub.s32 25, %s193
          %p195 = scmp.lt.s32.totalorder %s194, 13
          %s196 = scalar_select %p195, %s194, 13
          %s197 = smul.u32 128, %s196
        $region36: #{tpu_custom_call.1} parent=31 // pred_fallthru
          _
      $region32: #{tpu_custom_call.1} parent=5 // pred_fallthru
        _
      %p198 = scmp.le.s32.totalorder 1, %s14
      %p199 = scmp.lt.s32.totalorder %s14, 3
      %p200 = pnand %p198, %p199
      %p201 = pneg %p200
      // Predicated region
      $region37: #{tpu_custom_call.1} parent=5 // pred_check
        _
      $region38: #{tpu_custom_call.1} parent=5 // pred_check_branch
        %203 = sbr.rel (%p200) target = $region40
      $region39: #{tpu_custom_call.1} parent=5 // pred_region
        %s204 = ssub.s32 %s14, 1
        %s205 = smul.u32 13, %s19
        %s206 = ssub.s32 25, %s205
        %p207 = scmp.lt.s32.totalorder %s206, 13
        %s208 = scalar_select %p207, %s206, 13
        %s209 = smul.u32 128, %s208
        %p210 = scmp.lt.s32.totalorder %s205, 24
        %s211 = scalar_select %p210, %s205, 24
        %s212 = smul.addr %s211, 8
        %s213 = scalar_lea.vmem %s0, %s212
        %p214 = pneg %p40
        %p215 = pneg %p37
        %p216 = pneg %p61
        %p217 = pneg %p58
        %p218 = pneg %p82
        %p219 = pneg %p79
        %p220 = pneg %p103
        %p221 = pneg %p100
        %p222 = pneg %p124
        %p223 = pneg %p121
        %p224 = pneg %p150
        %p225 = pneg %p147
        %s226 = sand.u32 %s137, 1
        %s227 = scalar_lea.sflag [#allocation3], %s226
        %s228 = sand.u32 %s137, 1
        %s229 = smul.addr %s228, 104
        %s230 = scalar_lea.vmem [#allocation2], %s229
        %s231 = smul.u32 13, %s19
        %s232 = ssub.s32 25, %s231
        %p233 = scmp.lt.s32.totalorder %s232, 13
        %s234 = scalar_select %p233, %s232, 13
        %s235 = smul.u32 128, %s234
        %p236 = scmp.lt.s32.totalorder %s231, 24
        %s237 = scalar_select %p236, %s231, 24
        %s238 = smul.addr %s237, 8
        %s239 = scalar_lea.vmem %s0, %s238
        %s240 = smul.u32 13, %s19
        %s241 = ssub.s32 25, %s240
        %p242 = scmp.lt.s32.totalorder %s241, 13
        %s243 = scalar_select %p242, %s241, 13
        %s244 = smul.u32 128, %s243
        %s245 = smul.u32 13, %s19
        %s246 = ssub.s32 25, %s245
        %p247 = scmp.lt.s32.totalorder %s246, 13
        %s248 = scalar_select %p247, %s246, 13
        %s249 = smul.u32 128, %s248
        %v251 = vld [vmem:[%s239] sm:$0xff]
        %v252 = vld [vmem:[%s239 + $0x8] sm:$0xff]
        %v253 = vld [vmem:[%s239 + $0x10] sm:$0xff]
        %v254 = vld [vmem:[%s239 + $0x18] sm:$0xff]
        %v255 = vld [vmem:[%s239 + $0x20] sm:$0xff]
        %v256 = vld [vmem:[%s239 + $0x28] sm:$0xff]
        %v257 = vld [vmem:[%s239 + $0x30] sm:$0xff]
        %v258 = vld [vmem:[%s239 + $0x38] sm:$0xff]
        %v259 = vld [vmem:[%s239 + $0x40] sm:$0xff]
        %v260 = vld [vmem:[%s239 + $0x48] sm:$0xff]
        %v261 = vld [vmem:[%s239 + $0x50] sm:$0xff]
        %v262 = vld [vmem:[%s239 + $0x58] sm:$0xff]
        %v263 = vld [vmem:[%s239 + $0x60] sm:$0xff]
        %v264 = vpack.c.bf16 %v252, %v251
        %v265 = vpack.c.bf16 %v254, %v253
        %v266 = vpack.c.bf16 %v256, %v255
        %v267 = vpack.c.bf16 %v258, %v257
        %v268 = vpack.c.bf16 %v260, %v259
        %v269 = vpack.c.bf16 %v262, %v261
        %v270 = vpack.c.bf16 %v263, %v263
        %v271 = vld [vmem:[%s1] sm:$0xf]
        %v272 = vld [vmem:[%s1 + $0x4] sm:$0xf]
        %v273 = vld [vmem:[%s2] sm:$0x1]
        %v275 = vlaneseq
        %v276 = vshrl.u32 %v275, 7
        %v277 = vsub.s32 0, %v276
        %v278 = vrot.slane %v273, %v277
        %v282 = vunpack.c.l.b16 %v271
        %v283 = vunpack.c.l.b16 %v272
        %v284 = vpack.c.b16 %v283, %v282
        %vm286 = vcmask 130048
        %v288 = vsel %vm286, %v264, 0
        %v291 = vsel %vm286, %v265, 0
        %v294 = vsel %vm286, %v266, 0
        %v297 = vsel %vm286, %v267, 0
        %v300 = vsel %vm286, %v268, 0
        %v303 = vsel %vm286, %v269, 0
        %v306 = vsel %vm286, %v270, 0
        %308 = vmatprep.subr.bf16.mxu0 0
        %309 = vmatpush1.bf16.msra.mxu0 %v284
        %310 = vmatprep.subr.bf16.mxu0 0
        %311 = vmatpush1.bf16.msra.mxu0 0
        %312 = vmatprep.subr.bf16.mxu0 0
        %313 = vmatpush1.bf16.msra.mxu0 0
        %314 = vmatprep.subr.bf16.mxu0 0
        %315 = vmatpush1.bf16.msra.mxu0 0
        %316 = vmatprep.subr.bf16.mxu0 0
        %317 = vmatpush1.bf16.msra.mxu0 0
        %318 = vmatprep.subr.bf16.mxu0 0
        %319 = vmatpush1.bf16.msra.mxu0 0
        %320 = vmatprep.subr.bf16.mxu0 0
        %321 = vmatpush1.bf16.msra.mxu0 0
        %322 = vmatprep.subr.bf16.mxu0 0
        %323 = vmatpush1.bf16.msra.mxu0 0
        %324 = vmatprep.subr.bf16.mxu0 0
        %325 = vmatpush1.bf16.msra.mxu0 0
        %326 = vmatprep.subr.bf16.mxu0 0
        %327 = vmatpush1.bf16.msra.mxu0 0
        %328 = vmatprep.subr.bf16.mxu0 0
        %329 = vmatpush1.bf16.msra.mxu0 0
        %330 = vmatprep.subr.bf16.mxu0 0
        %331 = vmatpush1.bf16.msra.mxu0 0
        %332 = vmatprep.subr.bf16.mxu0 0
        %333 = vmatpush1.bf16.msra.mxu0 0
        %334 = vmatprep.subr.bf16.mxu0 0
        %335 = vmatpush1.bf16.msra.mxu0 0
        %336 = vmatprep.subr.bf16.mxu0 0
        %337 = vmatpush1.bf16.msra.mxu0 0
        %338 = vmatprep.subr.bf16.mxu0 0
        %339 = vmatpush1.bf16.msra.mxu0 0
        %340 = vmatprep.mubr.bf16.mxu0 0
        %341 = vmatmul.mubr.bf16.gmra.mrb[0].mxu0 %v288
        %v342 = vpop.f32.mrb[0].mxu0
        %v343 = vadd.f32 %v278, %v342
        %v344 = vpop.f32.mrb[0].mxu0
        %v345 = vpop.f32.mrb[0].mxu0
        %v346 = vadd.f32 %v278, %v345
        %v347 = vpop.f32.mrb[0].mxu0
        %348 = vmatprep.mubr.bf16.mxu0 0
        %349 = vmatmul.mubr.bf16.gmra.mrb[0].mxu0 %v291
        %v350 = vpop.f32.mrb[0].mxu0
        %v351 = vadd.f32 %v278, %v350
        %v352 = vpop.f32.mrb[0].mxu0
        %v353 = vpop.f32.mrb[0].mxu0
        %v354 = vadd.f32 %v278, %v353
        %v355 = vpop.f32.mrb[0].mxu0
        %356 = vmatprep.mubr.bf16.mxu0 0
        %357 = vmatmul.mubr.bf16.gmra.mrb[0].mxu0 %v294
        %v358 = vpop.f32.mrb[0].mxu0
        %v359 = vadd.f32 %v278, %v358
        %v360 = vpop.f32.mrb[0].mxu0
        %v361 = vpop.f32.mrb[0].mxu0
        %v362 = vadd.f32 %v278, %v361
        %v363 = vpop.f32.mrb[0].mxu0
        %364 = vmatprep.mubr.bf16.mxu0 0
        %365 = vmatmul.mubr.bf16.gmra.mrb[0].mxu0 %v297
        %v366 = vpop.f32.mrb[0].mxu0
        %v367 = vadd.f32 %v278, %v366
        %v368 = vpop.f32.mrb[0].mxu0
        %v369 = vpop.f32.mrb[0].mxu0
        %v370 = vadd.f32 %v278, %v369
        %v371 = vpop.f32.mrb[0].mxu0
        %372 = vmatprep.mubr.bf16.mxu0 0
        %373 = vmatmul.mubr.bf16.gmra.mrb[0].mxu0 %v300
        %v374 = vpop.f32.mrb[0].mxu0
        %v375 = vadd.f32 %v278, %v374
        %v376 = vpop.f32.mrb[0].mxu0
        %v377 = vpop.f32.mrb[0].mxu0
        %v378 = vadd.f32 %v278, %v377
        %v379 = vpop.f32.mrb[0].mxu0
        %380 = vmatprep.mubr.bf16.mxu0 0
        %381 = vmatmul.mubr.bf16.gmra.mrb[0].mxu0 %v303
        %v382 = vpop.f32.mrb[0].mxu0
        %v383 = vadd.f32 %v278, %v382
        %v384 = vpop.f32.mrb[0].mxu0
        %v385 = vpop.f32.mrb[0].mxu0
        %v386 = vadd.f32 %v278, %v385
        %v387 = vpop.f32.mrb[0].mxu0
        %388 = vmatprep.mubr.bf16.mxu0 0
        %389 = vmatmul.mubr.bf16.gmra.mrb[0].mxu0 %v306
        %v390 = vpop.f32.mrb[0].mxu0
        %v391 = vadd.f32 %v278, %v390
        %v392 = vpop.f32.mrb[0].mxu0
        %v393 = vpop.f32.mrb[0].mxu0
        %v394 = vpop.f32.mrb[0].mxu0
        %395 = vdwg.mxu0
        %v396 = vmul.f32 %v343, 0.01
        %v397 = vmul.f32 %v346, 0.01
        %v398 = vmul.f32 %v351, 0.01
        %v399 = vmul.f32 %v354, 0.01
        %v400 = vmul.f32 %v359, 0.01
        %v401 = vmul.f32 %v362, 0.01
        %v402 = vmul.f32 %v367, 0.01
        %v403 = vmul.f32 %v370, 0.01
        %v404 = vmul.f32 %v375, 0.01
        %v405 = vmul.f32 %v378, 0.01
        %v406 = vmul.f32 %v383, 0.01
        %v407 = vmul.f32 %v386, 0.01
        %v408 = vmul.f32 %v391, 0.01
        %v409 = vmax.f32 %v343, %v396
        %v410 = vmax.f32 %v346, %v397
        %v411 = vmax.f32 %v351, %v398
        %v412 = vmax.f32 %v354, %v399
        %v413 = vmax.f32 %v359, %v400
        %v414 = vmax.f32 %v362, %v401
        %v415 = vmax.f32 %v367, %v402
        %v416 = vmax.f32 %v370, %v403
        %v417 = vmax.f32 %v375, %v404
        %v418 = vmax.f32 %v378, %v405
        %v419 = vmax.f32 %v383, %v406
        %v420 = vmax.f32 %v386, %v407
        %v421 = vmax.f32 %v391, %v408
        %v422 = vpack.c.bf16 %v410, %v409
        %v423 = vpack.c.bf16 %v412, %v411
        %v424 = vpack.c.bf16 %v414, %v413
        %v425 = vpack.c.bf16 %v416, %v415
        %v426 = vpack.c.bf16 %v418, %v417
        %v427 = vpack.c.bf16 %v420, %v419
        %v428 = vpack.c.bf16 %v421, %v421
        %v429 = vld [vmem:[%s3] sm:$0xf]
        %v430 = vld [vmem:[%s3 + $0x4] sm:$0xf]
        %v431 = vld [vmem:[%s3 + $0x8] sm:$0xf]
        %v432 = vld [vmem:[%s3 + $0xc] sm:$0xf]
        %v433 = vld [vmem:[%s3 + $0x10] sm:$0xf]
        %v434 = vld [vmem:[%s3 + $0x14] sm:$0xf]
        %v435 = vld [vmem:[%s3 + $0x18] sm:$0xf]
        %v436 = vld [vmem:[%s3 + $0x1c] sm:$0xf]
        %v437 = vld [vmem:[%s3 + $0x20] sm:$0xf]
        %v438 = vld [vmem:[%s3 + $0x24] sm:$0xf]
        %v439 = vld [vmem:[%s3 + $0x28] sm:$0xf]
        %v440 = vld [vmem:[%s3 + $0x2c] sm:$0xf]
        %v441 = vld [vmem:[%s3 + $0x30] sm:$0xf]
        %v442 = vld [vmem:[%s3 + $0x34] sm:$0xf]
        %v443 = vld [vmem:[%s3 + $0x38] sm:$0xf]
        %v444 = vld [vmem:[%s3 + $0x3c] sm:$0xf]
        %v445 = vld [vmem:[%s4] sm:$0x1]
        %v447 = vlaneseq
        %v448 = vshrl.u32 %v447, 7
        %v449 = vsub.s32 0, %v448
        %v450 = vrot.slane %v445, %v449
        %v468 = vunpack.c.l.b16 %v429
        %v469 = vunpack.c.l.b16 %v430
        %v470 = vunpack.c.l.b16 %v431
        %v471 = vunpack.c.l.b16 %v432
        %v472 = vunpack.c.l.b16 %v433
        %v473 = vunpack.c.l.b16 %v434
        %v474 = vunpack.c.l.b16 %v435
        %v475 = vunpack.c.l.b16 %v436
        %v476 = vunpack.c.l.b16 %v437
        %v477 = vunpack.c.l.b16 %v438
        %v478 = vunpack.c.l.b16 %v439
        %v479 = vunpack.c.l.b16 %v440
        %v480 = vunpack.c.l.b16 %v441
        %v481 = vunpack.c.l.b16 %v442
        %v482 = vunpack.c.l.b16 %v443
        %v483 = vunpack.c.l.b16 %v444
        %v484 = vpack.c.b16 %v469, %v468
        %v485 = vpack.c.b16 %v471, %v470
        %v486 = vpack.c.b16 %v473, %v472
        %v487 = vpack.c.b16 %v475, %v474
        %v488 = vpack.c.b16 %v477, %v476
        %v489 = vpack.c.b16 %v479, %v478
        %v490 = vpack.c.b16 %v481, %v480
        %v491 = vpack.c.b16 %v483, %v482
        %500 = vmatprep.subr.bf16.mxu0 0
        %501 = vmatpush1.bf16.msra.mxu0 %v484
        %502 = vmatprep.subr.bf16.mxu0 0
        %503 = vmatpush1.bf16.msra.mxu0 %v485
        %504 = vmatprep.subr.bf16.mxu0 0
        %505 = vmatpush1.bf16.msra.mxu0 %v486
        %506 = vmatprep.subr.bf16.mxu0 0
        %507 = vmatpush1.bf16.msra.mxu0 %v487
        %508 = vmatprep.subr.bf16.mxu0 0
        %509 = vmatpush1.bf16.msra.mxu0 %v488
        %510 = vmatprep.subr.bf16.mxu0 0
        %511 = vmatpush1.bf16.msra.mxu0 %v489
        %512 = vmatprep.subr.bf16.mxu0 0
        %513 = vmatpush1.bf16.msra.mxu0 %v490
        %514 = vmatprep.subr.bf16.mxu0 0
        %515 = vmatpush1.bf16.msra.mxu0 %v491
        %516 = vmatprep.subr.bf16.mxu0 0
        %517 = vmatpush1.bf16.msra.mxu0 0
        %518 = vmatprep.subr.bf16.mxu0 0
        %519 = vmatpush1.bf16.msra.mxu0 0
        %520 = vmatprep.subr.bf16.mxu0 0
        %521 = vmatpush1.bf16.msra.mxu0 0
        %522 = vmatprep.subr.bf16.mxu0 0
        %523 = vmatpush1.bf16.msra.mxu0 0
        %524 = vmatprep.subr.bf16.mxu0 0
        %525 = vmatpush1.bf16.msra.mxu0 0
        %526 = vmatprep.subr.bf16.mxu0 0
        %527 = vmatpush1.bf16.msra.mxu0 0
        %528 = vmatprep.subr.bf16.mxu0 0
        %529 = vmatpush1.bf16.msra.mxu0 0
        %530 = vmatprep.subr.bf16.mxu0 0
        %531 = vmatpush1.bf16.msra.mxu0 0
        %532 = vmatprep.mubr.bf16.mxu0 0
        %533 = vmatmul.mubr.bf16.gmra.mrb[0].mxu0 %v422
        %v534 = vpop.f32.mrb[0].mxu0
        %v535 = vadd.f32 %v450, %v534
        %v536 = vpop.f32.mrb[0].mxu0
        %v537 = vpop.f32.mrb[0].mxu0
        %v538 = vadd.f32 %v450, %v537
        %v539 = vpop.f32.mrb[0].mxu0
        %540 = vmatprep.mubr.bf16.mxu0 0
        %541 = vmatmul.mubr.bf16.gmra.mrb[0].mxu0 %v423
        %v542 = vpop.f32.mrb[0].mxu0
        %v543 = vadd.f32 %v450, %v542
        %v544 = vpop.f32.mrb[0].mxu0
        %v545 = vpop.f32.mrb[0].mxu0
        %v546 = vadd.f32 %v450, %v545
        %v547 = vpop.f32.mrb[0].mxu0
        %548 = vmatprep.mubr.bf16.mxu0 0
        %549 = vmatmul.mubr.bf16.gmra.mrb[0].mxu0 %v424
        %v550 = vpop.f32.mrb[0].mxu0
        %v551 = vadd.f32 %v450, %v550
        %v552 = vpop.f32.mrb[0].mxu0
        %v553 = vpop.f32.mrb[0].mxu0
        %v554 = vadd.f32 %v450, %v553
        %v555 = vpop.f32.mrb[0].mxu0
        %556 = vmatprep.mubr.bf16.mxu0 0
        %557 = vmatmul.mubr.bf16.gmra.mrb[0].mxu0 %v425
        %v558 = vpop.f32.mrb[0].mxu0
        %v559 = vadd.f32 %v450, %v558
        %v560 = vpop.f32.mrb[0].mxu0
        %v561 = vpop.f32.mrb[0].mxu0
        %v562 = vadd.f32 %v450, %v561
        %v563 = vpop.f32.mrb[0].mxu0
        %564 = vmatprep.mubr.bf16.mxu0 0
        %565 = vmatmul.mubr.bf16.gmra.mrb[0].mxu0 %v426
        %v566 = vpop.f32.mrb[0].mxu0
        %v567 = vadd.f32 %v450, %v566
        %v568 = vpop.f32.mrb[0].mxu0
        %v569 = vpop.f32.mrb[0].mxu0
        %v570 = vadd.f32 %v450, %v569
        %v571 = vpop.f32.mrb[0].mxu0
        %572 = vmatprep.mubr.bf16.mxu0 0
        %573 = vmatmul.mubr.bf16.gmra.mrb[0].mxu0 %v427
        %v574 = vpop.f32.mrb[0].mxu0
        %v575 = vadd.f32 %v450, %v574
        %v576 = vpop.f32.mrb[0].mxu0
        %v577 = vpop.f32.mrb[0].mxu0
        %v578 = vadd.f32 %v450, %v577
        %v579 = vpop.f32.mrb[0].mxu0
        %580 = vmatprep.mubr.bf16.mxu0 0
        %581 = vmatmul.mubr.bf16.gmra.mrb[0].mxu0 %v428
        %v582 = vpop.f32.mrb[0].mxu0
        %v583 = vadd.f32 %v450, %v582
        %v584 = vpop.f32.mrb[0].mxu0
        %v585 = vpop.f32.mrb[0].mxu0
        %v586 = vpop.f32.mrb[0].mxu0
        %587 = vdwg.mxu0
        %588 = vst [vmem:[%s230] sm:$0xff] %v535
        %589 = vst [vmem:[%s230 + $0x8] sm:$0xff] %v538
        %590 = vst [vmem:[%s230 + $0x10] sm:$0xff] %v543
        %591 = vst [vmem:[%s230 + $0x18] sm:$0xff] %v546
        %592 = vst [vmem:[%s230 + $0x20] sm:$0xff] %v551
        %593 = vst [vmem:[%s230 + $0x28] sm:$0xff] %v554
        %594 = vst [vmem:[%s230 + $0x30] sm:$0xff] %v559
        %595 = vst [vmem:[%s230 + $0x38] sm:$0xff] %v562
        %596 = vst [vmem:[%s230 + $0x40] sm:$0xff] %v567
        %597 = vst [vmem:[%s230 + $0x48] sm:$0xff] %v570
        %598 = vst [vmem:[%s230 + $0x50] sm:$0xff] %v575
        %599 = vst [vmem:[%s230 + $0x58] sm:$0xff] %v578
        %600 = vst [vmem:[%s230 + $0x60] sm:$0xff] %v583
        %s601 = sand.u32 %s137, 1
        %s602 = scalar_lea.sflag [#allocation3], %s601
        %s603 = sand.u32 %s137, 1
        %s604 = smul.addr %s603, 104
        %s605 = scalar_lea.vmem [#allocation2], %s604
        // Predicated region
        $region41: #{tpu_custom_call.1} parent=39 // pred_check
          %p606 = pneg %p147
        $region42: #{tpu_custom_call.1} parent=39 // pred_check_branch
          %608 = sbr.rel (%p606) target = $region44
        $region43: #{tpu_custom_call.1} parent=39 // pred_region
          %s609 = smul.u32 13, %s19
          %s610 = ssub.s32 25, %s609
          %p611 = scmp.lt.s32.totalorder %s610, 13
          %s612 = scalar_select %p611, %s610, 13
          %s613 = smul.u32 128, %s612
          %s615 = ssub.s32 1664, %s613
          %616 = vsyncadd %s602, %s615
          %p617 = scmp.ne.s32.totalorder 0, %s613
          %s618 = smul.addr %s609, 128
          %s619 = scalar_lea.hbm %s5, %s618
          %s620 = smul.u32 8, %s612
          %s621 = sshll.u32 %s605, 4
          %s622 = int_to_ptr.vmem [resolvable:$true] %s621
          %s623 = sshll.u32 %s620, 4
          %627 = dma.vmem_to_hbm [thread:$0]  (%p617), %s622, %s623, %s619, %s602, 128, 128, 8
        $region44: #{tpu_custom_call.1} parent=39 // pred_fallthru
          _
      $region40: #{tpu_custom_call.1} parent=5 // pred_fallthru
        _
      %p628 = scmp.le.s32.totalorder 2, %s14
      // Predicated region
      $region45: #{tpu_custom_call.1} parent=5 // pred_check
        %p629 = pneg %p628
      $region46: #{tpu_custom_call.1} parent=5 // pred_check_branch
        %631 = sbr.rel (%p629) target = $region48
      $region47: #{tpu_custom_call.1} parent=5 // pred_region
        %s632 = ssub.s32 %s14, 2
        // Predicated region
        $region49: #{tpu_custom_call.1} parent=47 // pred_check
          %p633 = pneg %p153
        $region50: #{tpu_custom_call.1} parent=47 // pred_check_branch
          %635 = sbr.rel (%p633) target = $region52
        $region51: #{tpu_custom_call.1} parent=47 // pred_region
          %s636 = sand.u32 %s138, 1
          %s637 = scalar_lea.sflag [#allocation3], %s636
          %s638 = sand.u32 %s138, 1
          %s639 = smul.addr %s638, 104
          %s640 = scalar_lea.vmem [#allocation2], %s639
          %641 = dma.done %s637, 1664
        $region52: #{tpu_custom_call.1} parent=47 // pred_fallthru
          _
      $region48: #{tpu_custom_call.1} parent=5 // pred_fallthru
        _
    $region6: #{tpu_custom_call.1} parent=1 // loop_footer
      %s18 = sadd.s32 1, %s14
    $region7: #{tpu_custom_call.1} parent=1 // loop_footer_branch
      %13 = sbr.rel target = $region3
    $region8: #{tpu_custom_call.1} parent=1 // loop_exit
      _
    %642 = vsyncpa [#allocation3], 1
    %s643 = scalar_lea.sflag [#allocation3], 1
    %644 = vsyncpa %s643, 1

// kernel: tpu_custom_call.1
$region0: #{tpu_custom_call.1}
  #allocation0 [shape = 'u32[]', space=smem, size = 0x4, offset = 0x4, fixed_abs, tag = 'smem constant byte address 0x4 - core index']
  #allocation1 [shape = 'u32[144,128]{1,0:T(1,128)}', space=vmem, size = 0x12000, scoped, tag = 'internal scratch']
  %s0 = inlined_call_operand.vmem [shape: f32[200,16], index: 0, kind: input, shape index: {}]
  %s1 = inlined_call_operand.vmem [shape: bf16[16,128], index: 1, kind: input, shape index: {}]
  %s2 = inlined_call_operand.vmem [shape: f32[1,128], index: 2, kind: input, shape index: {}]
  %s3 = inlined_call_operand.vmem [shape: bf16[128,128], index: 3, kind: input, shape index: {}]
  %s4 = inlined_call_operand.vmem [shape: f32[1,128], index: 4, kind: input, shape index: {}]
  %s5 = inlined_call_operand.hbm [shape: f32[200,128], index: 5, kind: output, shape index: {}]
  %s6 = sld [smem:[#allocation0]]
  $region53: #{tpu_custom_call.1} parent=0
    _
  %s8 = ssub.s32 1, %s6
  %s9 = scalar_select 0, %s8, %s6
  $region1: #{tpu_custom_call.1} parent=0
    #allocation2 [shape = 'u8[106496]{0}', space=vmem, size = 0x1a000, scoped, tag = 'output window, operand 0']
    #allocation3 [shape = 's32[2]{0}', space=sflag, size = 0x8, scoped, tag = 'scoped memory for tpu_custom_call.1']
    %10 = vsyncpa [#allocation3], 0
    %s11 = scalar_lea.sflag [#allocation3], 1
    %12 = vsyncpa %s11, 0
    loop: start=0, step=1, limit=4
    $region2: #{tpu_custom_call.1} parent=1 // loop_pre_header
      _
    $region3: #{tpu_custom_call.1} parent=1 // loop_header
      %s14 = sphi 0, %s18
      %p15 = scmp.ge.s32.totalorder %s14, 4
      %s24 = sphi 0, %s26
      %s27 = sphi 0, %s24
      %s28 = sphi 0, %s27
      %s44 = sphi 0, %s28
      %s48 = sphi 0, %s48
      %s50 = sphi 0, %s48
      %s51 = sphi 0, %s50
      %s65 = sphi 0, %s51
      %s69 = sphi 0, %s69
      %s71 = sphi 0, %s69
      %s72 = sphi 0, %s71
      %s86 = sphi 0, %s72
      %s90 = sphi 0, %s90
      %s92 = sphi 0, %s90
      %s93 = sphi 0, %s92
      %s107 = sphi 0, %s93
      %s111 = sphi 0, %s111
      %s113 = sphi 0, %s111
      %s114 = sphi 0, %s113
      %s128 = sphi 0, %s114
      %s134 = sphi 0, %s136
      %s137 = sphi 0, %s134
      %s138 = sphi 0, %s137
      %s154 = sphi 0, %s138
    $region4: #{tpu_custom_call.1} parent=1 // loop_header_branch
      %17 = sbr.rel (%p15) target = $region8
    $region5: #{tpu_custom_call.1} parent=1 // loop_body
      %s19 = ssub.s32 %s14, 1
      %s20 = ssub.s32 %s14, 2
      %s21 = sadd.s32 %s14, 1
      %s22 = ssub.s32 %s14, %s21
      %p23 = scmp.eq.s32.totalorder %s22, 0
      %s25 = sadd.s32 %s24, 1
      %s26 = scalar_select %p23, %s24, %s25
      %p29 = pneg %p23
      %p30 = scmp.eq.s32.totalorder %s14, 1
      %p31 = por %p29, %p30
      %p32 = scmp.ne.s32.totalorder %s24, %s27
      %p33 = scmp.eq.s32.totalorder %s14, 0
      %p34 = por %p32, %p33
      %p35 = scmp.ne.s32.totalorder %s24, %s27
      %p36 = scmp.eq.s32.totalorder %s19, 1
      %p37 = por %p35, %p36
      %p38 = scmp.ne.s32.totalorder %s27, %s28
      %p39 = scmp.eq.s32.totalorder %s19, 0
      %p40 = por %p38, %p39
      %p41 = scmp.ne.s32.totalorder %s27, %s28
      %p42 = scmp.eq.s32.totalorder %s20, 1
      %p43 = por %p41, %p42
      %p45 = scmp.ne.s32.totalorder %s28, %s44
      %p46 = scmp.eq.s32.totalorder %s20, 0
      %p47 = por %p45, %p46
      %s49 = sadd.s32 %s48, 1
      %p52 = scmp.eq.s32.totalorder %s14, 1
      %p53 = scmp.ne.s32.totalorder %s48, %s50
      %p54 = scmp.eq.s32.totalorder %s14, 0
      %p55 = por %p53, %p54
      %p56 = scmp.ne.s32.totalorder %s48, %s50
      %p57 = scmp.eq.s32.totalorder %s19, 1
      %p58 = por %p56, %p57
      %p59 = scmp.ne.s32.totalorder %s50, %s51
      %p60 = scmp.eq.s32.totalorder %s19, 0
      %p61 = por %p59, %p60
      %p62 = scmp.ne.s32.totalorder %s50, %s51
      %p63 = scmp.eq.s32.totalorder %s20, 1
      %p64 = por %p62, %p63
      %p66 = scmp.ne.s32.totalorder %s51, %s65
      %p67 = scmp.eq.s32.totalorder %s20, 0
      %p68 = por %p66, %p67
      %s70 = sadd.s32 %s69, 1
      %p73 = scmp.eq.s32.totalorder %s14, 1
      %p74 = scmp.ne.s32.totalorder %s69, %s71
      %p75 = scmp.eq.s32.totalorder %s14, 0
      %p76 = por %p74, %p75
      %p77 = scmp.ne.s32.totalorder %s69, %s71
      %p78 = scmp.eq.s32.totalorder %s19, 1
      %p79 = por %p77, %p78
      %p80 = scmp.ne.s32.totalorder %s71, %s72
      %p81 = scmp.eq.s32.totalorder %s19, 0
      %p82 = por %p80, %p81
      %p83 = scmp.ne.s32.totalorder %s71, %s72
      %p84 = scmp.eq.s32.totalorder %s20, 1
      %p85 = por %p83, %p84
      %p87 = scmp.ne.s32.totalorder %s72, %s86
      %p88 = scmp.eq.s32.totalorder %s20, 0
      %p89 = por %p87, %p88
      %s91 = sadd.s32 %s90, 1
      %p94 = scmp.eq.s32.totalorder %s14, 1
      %p95 = scmp.ne.s32.totalorder %s90, %s92
      %p96 = scmp.eq.s32.totalorder %s14, 0
      %p97 = por %p95, %p96
      %p98 = scmp.ne.s32.totalorder %s90, %s92
      %p99 = scmp.eq.s32.totalorder %s19, 1
      %p100 = por %p98, %p99
      %p101 = scmp.ne.s32.totalorder %s92, %s93
      %p102 = scmp.eq.s32.totalorder %s19, 0
      %p103 = por %p101, %p102
      %p104 = scmp.ne.s32.totalorder %s92, %s93
      %p105 = scmp.eq.s32.totalorder %s20, 1
      %p106 = por %p104, %p105
      %p108 = scmp.ne.s32.totalorder %s93, %s107
      %p109 = scmp.eq.s32.totalorder %s20, 0
      %p110 = por %p108, %p109
      %s112 = sadd.s32 %s111, 1
      %p115 = scmp.eq.s32.totalorder %s14, 1
      %p116 = scmp.ne.s32.totalorder %s111, %s113
      %p117 = scmp.eq.s32.totalorder %s14, 0
      %p118 = por %p116, %p117
      %p119 = scmp.ne.s32.totalorder %s111, %s113
      %p120 = scmp.eq.s32.totalorder %s19, 1
      %p121 = por %p119, %p120
      %p122 = scmp.ne.s32.totalorder %s113, %s114
      %p123 = scmp.eq.s32.totalorder %s19, 0
      %p124 = por %p122, %p123
      %p125 = scmp.ne.s32.totalorder %s113, %s114
      %p126 = scmp.eq.s32.totalorder %s20, 1
      %p127 = por %p125, %p126
      %p129 = scmp.ne.s32.totalorder %s114, %s128
      %p130 = scmp.eq.s32.totalorder %s20, 0
      %p131 = por %p129, %p130
      %s132 = ssub.s32 %s14, %s21
      %p133 = scmp.eq.s32.totalorder %s132, 0
      %s135 = sadd.s32 %s134, 1
      %s136 = scalar_select %p133, %s134, %s135
      %p139 = pneg %p133
      %p140 = scmp.eq.s32.totalorder %s14, 1
      %p141 = por %p139, %p140
      %p142 = scmp.ne.s32.totalorder %s134, %s137
      %p143 = scmp.eq.s32.totalorder %s14, 0
      %p144 = por %p142, %p143
      %p145 = scmp.ne.s32.totalorder %s134, %s137
      %p146 = scmp.eq.s32.totalorder %s19, 1
      %p147 = por %p145, %p146
      %p148 = scmp.ne.s32.totalorder %s137, %s138
      %p149 = scmp.eq.s32.totalorder %s19, 0
      %p150 = por %p148, %p149
      %p151 = scmp.ne.s32.totalorder %s137, %s138
      %p152 = scmp.eq.s32.totalorder %s20, 1
      %p153 = por %p151, %p152
      %p155 = scmp.ne.s32.totalorder %s138, %s154
      %p156 = scmp.eq.s32.totalorder %s20, 0
      %p157 = por %p155, %p156
      %p158 = scmp.le.s32.totalorder 1, %s14
      %p159 = scmp.lt.s32.totalorder %s14, 3
      %p160 = pnand %p158, %p159
      %p161 = pneg %p160
      // Predicated region
      $region9: #{tpu_custom_call.1} parent=5 // pred_check
        _
      $region10: #{tpu_custom_call.1} parent=5 // pred_check_branch
        %163 = sbr.rel (%p160) target = $region12
      $region11: #{tpu_custom_call.1} parent=5 // pred_region
        %s164 = ssub.s32 %s14, 1
        // Predicated region
        $region13: #{tpu_custom_call.1} parent=11 // pred_check
          %p165 = pneg %p61
        $region14: #{tpu_custom_call.1} parent=11 // pred_check_branch
          %167 = sbr.rel (%p165) target = $region16
        $region15: #{tpu_custom_call.1} parent=11 // pred_region
          _
        $region16: #{tpu_custom_call.1} parent=11 // pred_fallthru
          _
        // Predicated region
        $region17: #{tpu_custom_call.1} parent=11 // pred_check
          %p168 = pneg %p82
        $region18: #{tpu_custom_call.1} parent=11 // pred_check_branch
          %170 = sbr.rel (%p168) target = $region20
        $region19: #{tpu_custom_call.1} parent=11 // pred_region
          _
        $region20: #{tpu_custom_call.1} parent=11 // pred_fallthru
          _
        // Predicated region
        $region21: #{tpu_custom_call.1} parent=11 // pred_check
          %p171 = pneg %p103
        $region22: #{tpu_custom_call.1} parent=11 // pred_check_branch
          %173 = sbr.rel (%p171) target = $region24
        $region23: #{tpu_custom_call.1} parent=11 // pred_region
          _
        $region24: #{tpu_custom_call.1} parent=11 // pred_fallthru
          _
        // Predicated region
        $region25: #{tpu_custom_call.1} parent=11 // pred_check
          %p174 = pneg %p124
        $region26: #{tpu_custom_call.1} parent=11 // pred_check_branch
          %176 = sbr.rel (%p174) target = $region28
        $region27: #{tpu_custom_call.1} parent=11 // pred_region
          _
        $region28: #{tpu_custom_call.1} parent=11 // pred_fallthru
          _
      $region12: #{tpu_custom_call.1} parent=5 // pred_fallthru
        _
      %p177 = scmp.lt.s32.totalorder %s14, 2
      // Predicated region
      $region29: #{tpu_custom_call.1} parent=5 // pred_check
        %p178 = pneg %p177
      $region30: #{tpu_custom_call.1} parent=5 // pred_check_branch
        %180 = sbr.rel (%p178) target = $region32
      $region31: #{tpu_custom_call.1} parent=5 // pred_region
        // Predicated region
        $region33: #{tpu_custom_call.1} parent=31 // pred_check
          %p181 = pneg %p34
        $region34: #{tpu_custom_call.1} parent=31 // pred_check_branch
          %183 = sbr.rel (%p181) target = $region36
        $region35: #{tpu_custom_call.1} parent=31 // pred_region
          %s184 = smul.u32 13, %s14
          %s185 = ssub.s32 25, %s184
          %p186 = scmp.lt.s32.totalorder %s185, 13
          %s187 = scalar_select %p186, %s185, 13
          %s188 = smul.u32 128, %s187
          %p189 = scmp.lt.s32.totalorder %s184, 24
          %s190 = scalar_select %p189, %s184, 24
          %s191 = smul.addr %s190, 8
          %s192 = scalar_lea.vmem %s0, %s191
          %s193 = smul.u32 13, %s14
          %s194 = ssub.s32 25, %s193
          %p195 = scmp.lt.s32.totalorder %s194, 13
          %s196 = scalar_select %p195, %s194, 13
          %s197 = smul.u32 128, %s196
        $region36: #{tpu_custom_call.1} parent=31 // pred_fallthru
          _
      $region32: #{tpu_custom_call.1} parent=5 // pred_fallthru
        _
      %p198 = scmp.le.s32.totalorder 1, %s14
      %p199 = scmp.lt.s32.totalorder %s14, 3
      %p200 = pnand %p198, %p199
      %p201 = pneg %p200
      // Predicated region
      $region37: #{tpu_custom_call.1} parent=5 // pred_check
        _
      $region38: #{tpu_custom_call.1} parent=5 // pred_check_branch
        %203 = sbr.rel (%p200) target = $region40
      $region39: #{tpu_custom_call.1} parent=5 // pred_region
        %s204 = ssub.s32 %s14, 1
        %s205 = smul.u32 13, %s19
        %s206 = ssub.s32 25, %s205
        %p207 = scmp.lt.s32.totalorder %s206, 13
        %s208 = scalar_select %p207, %s206, 13
        %s209 = smul.u32 128, %s208
        %p210 = scmp.lt.s32.totalorder %s205, 24
        %s211 = scalar_select %p210, %s205, 24
        %s212 = smul.addr %s211, 8
        %s213 = scalar_lea.vmem %s0, %s212
        %p214 = pneg %p40
        %p215 = pneg %p37
        %p216 = pneg %p61
        %p217 = pneg %p58
        %p218 = pneg %p82
        %p219 = pneg %p79
        %p220 = pneg %p103
        %p221 = pneg %p100
        %p222 = pneg %p124
        %p223 = pneg %p121
        %p224 = pneg %p150
        %p225 = pneg %p147
        %s226 = sand.u32 %s137, 1
        %s227 = scalar_lea.sflag [#allocation3], %s226
        %s228 = sand.u32 %s137, 1
        %s229 = smul.addr %s228, 104
        %s230 = scalar_lea.vmem [#allocation2], %s229
        %s231 = smul.u32 13, %s19
        %s232 = ssub.s32 25, %s231
        %p233 = scmp.lt.s32.totalorder %s232, 13
        %s234 = scalar_select %p233, %s232, 13
        %s235 = smul.u32 128, %s234
        %p236 = scmp.lt.s32.totalorder %s231, 24
        %s237 = scalar_select %p236, %s231, 24
        %s238 = smul.addr %s237, 8
        %s239 = scalar_lea.vmem %s0, %s238
        %s240 = smul.u32 13, %s19
        %s241 = ssub.s32 25, %s240
        %p242 = scmp.lt.s32.totalorder %s241, 13
        %s243 = scalar_select %p242, %s241, 13
        %s244 = smul.u32 128, %s243
        %s245 = smul.u32 13, %s19
        %s246 = ssub.s32 25, %s245
        %p247 = scmp.lt.s32.totalorder %s246, 13
        %s248 = scalar_select %p247, %s246, 13
        %s249 = smul.u32 128, %s248
        %v251 = vld [vmem:[%s239] sm:$0xff]
        %v252 = vld [vmem:[%s239 + $0x8] sm:$0xff]
        %v253 = vld [vmem:[%s239 + $0x10] sm:$0xff]
        %v254 = vld [vmem:[%s239 + $0x18] sm:$0xff]
        %v255 = vld [vmem:[%s239 + $0x20] sm:$0xff]
        %v256 = vld [vmem:[%s239 + $0x28] sm:$0xff]
        %v257 = vld [vmem:[%s239 + $0x30] sm:$0xff]
        %v258 = vld [vmem:[%s239 + $0x38] sm:$0xff]
        %v259 = vld [vmem:[%s239 + $0x40] sm:$0xff]
        %v260 = vld [vmem:[%s239 + $0x48] sm:$0xff]
        %v261 = vld [vmem:[%s239 + $0x50] sm:$0xff]
        %v262 = vld [vmem:[%s239 + $0x58] sm:$0xff]
        %v263 = vld [vmem:[%s239 + $0x60] sm:$0xff]
        %v264 = vpack.c.bf16 %v252, %v251
        %v265 = vpack.c.bf16 %v254, %v253
        %v266 = vpack.c.bf16 %v256, %v255
        %v267 = vpack.c.bf16 %v258, %v257
        %v268 = vpack.c.bf16 %v260, %v259
        %v269 = vpack.c.bf16 %v262, %v261
        %v270 = vpack.c.bf16 %v263, %v263
        %v271 = vld [vmem:[%s1] sm:$0xf]
        %v272 = vld [vmem:[%s1 + $0x4] sm:$0xf]
        %v273 = vld [vmem:[%s2] sm:$0x1]
        %v275 = vlaneseq
        %v276 = vshrl.u32 %v275, 7
        %v277 = vsub.s32 0, %v276
        %v278 = vrot.slane %v273, %v277
        %v282 = vunpack.c.l.b16 %v271
        %v283 = vunpack.c.l.b16 %v272
        %v284 = vpack.c.b16 %v283, %v282
        %vm286 = vcmask 130048
        %v288 = vsel %vm286, %v264, 0
        %v291 = vsel %vm286, %v265, 0
        %v294 = vsel %vm286, %v266, 0
        %v297 = vsel %vm286, %v267, 0
        %v300 = vsel %vm286, %v268, 0
        %v303 = vsel %vm286, %v269, 0
        %v306 = vsel %vm286, %v270, 0
        %308 = vmatprep.subr.bf16.mxu0 0
        %309 = vmatpush1.bf16.msra.mxu0 %v284
        %310 = vmatprep.subr.bf16.mxu0 0
        %311 = vmatpush1.bf16.msra.mxu0 0
        %312 = vmatprep.subr.bf16.mxu0 0
        %313 = vmatpush1.bf16.msra.mxu0 0
        %314 = vmatprep.subr.bf16.mxu0 0
        %315 = vmatpush1.bf16.msra.mxu0 0
        %316 = vmatprep.subr.bf16.mxu0 0
        %317 = vmatpush1.bf16.msra.mxu0 0
        %318 = vmatprep.subr.bf16.mxu0 0
        %319 = vmatpush1.bf16.msra.mxu0 0
        %320 = vmatprep.subr.bf16.mxu0 0
        %321 = vmatpush1.bf16.msra.mxu0 0
        %322 = vmatprep.subr.bf16.mxu0 0
        %323 = vmatpush1.bf16.msra.mxu0 0
        %324 = vmatprep.subr.bf16.mxu0 0
        %325 = vmatpush1.bf16.msra.mxu0 0
        %326 = vmatprep.subr.bf16.mxu0 0
        %327 = vmatpush1.bf16.msra.mxu0 0
        %328 = vmatprep.subr.bf16.mxu0 0
        %329 = vmatpush1.bf16.msra.mxu0 0
        %330 = vmatprep.subr.bf16.mxu0 0
        %331 = vmatpush1.bf16.msra.mxu0 0
        %332 = vmatprep.subr.bf16.mxu0 0
        %333 = vmatpush1.bf16.msra.mxu0 0
        %334 = vmatprep.subr.bf16.mxu0 0
        %335 = vmatpush1.bf16.msra.mxu0 0
        %336 = vmatprep.subr.bf16.mxu0 0
        %337 = vmatpush1.bf16.msra.mxu0 0
        %338 = vmatprep.subr.bf16.mxu0 0
        %339 = vmatpush1.bf16.msra.mxu0 0
        %340 = vmatprep.mubr.bf16.mxu0 0
        %341 = vmatmul.mubr.bf16.gmra.mrb[0].mxu0 %v288
        %v342 = vpop.f32.mrb[0].mxu0
        %v343 = vadd.f32 %v278, %v342
        %v344 = vpop.f32.mrb[0].mxu0
        %v345 = vpop.f32.mrb[0].mxu0
        %v346 = vadd.f32 %v278, %v345
        %v347 = vpop.f32.mrb[0].mxu0
        %348 = vmatprep.mubr.bf16.mxu0 0
        %349 = vmatmul.mubr.bf16.gmra.mrb[0].mxu0 %v291
        %v350 = vpop.f32.mrb[0].mxu0
        %v351 = vadd.f32 %v278, %v350
        %v352 = vpop.f32.mrb[0].mxu0
        %v353 = vpop.f32.mrb[0].mxu0
        %v354 = vadd.f32 %v278, %v353
        %v355 = vpop.f32.mrb[0].mxu0
        %356 = vmatprep.mubr.bf16.mxu0 0
        %357 = vmatmul.mubr.bf16.gmra.mrb[0].mxu0 %v294
        %v358 = vpop.f32.mrb[0].mxu0
        %v359 = vadd.f32 %v278, %v358
        %v360 = vpop.f32.mrb[0].mxu0
        %v361 = vpop.f32.mrb[0].mxu0
        %v362 = vadd.f32 %v278, %v361
        %v363 = vpop.f32.mrb[0].mxu0
        %364 = vmatprep.mubr.bf16.mxu0 0
        %365 = vmatmul.mubr.bf16.gmra.mrb[0].mxu0 %v297
        %v366 = vpop.f32.mrb[0].mxu0
        %v367 = vadd.f32 %v278, %v366
        %v368 = vpop.f32.mrb[0].mxu0
        %v369 = vpop.f32.mrb[0].mxu0
        %v370 = vadd.f32 %v278, %v369
        %v371 = vpop.f32.mrb[0].mxu0
        %372 = vmatprep.mubr.bf16.mxu0 0
        %373 = vmatmul.mubr.bf16.gmra.mrb[0].mxu0 %v300
        %v374 = vpop.f32.mrb[0].mxu0
        %v375 = vadd.f32 %v278, %v374
        %v376 = vpop.f32.mrb[0].mxu0
        %v377 = vpop.f32.mrb[0].mxu0
        %v378 = vadd.f32 %v278, %v377
        %v379 = vpop.f32.mrb[0].mxu0
        %380 = vmatprep.mubr.bf16.mxu0 0
        %381 = vmatmul.mubr.bf16.gmra.mrb[0].mxu0 %v303
        %v382 = vpop.f32.mrb[0].mxu0
        %v383 = vadd.f32 %v278, %v382
        %v384 = vpop.f32.mrb[0].mxu0
        %v385 = vpop.f32.mrb[0].mxu0
        %v386 = vadd.f32 %v278, %v385
        %v387 = vpop.f32.mrb[0].mxu0
        %388 = vmatprep.mubr.bf16.mxu0 0
        %389 = vmatmul.mubr.bf16.gmra.mrb[0].mxu0 %v306
        %v390 = vpop.f32.mrb[0].mxu0
        %v391 = vadd.f32 %v278, %v390
        %v392 = vpop.f32.mrb[0].mxu0
        %v393 = vpop.f32.mrb[0].mxu0
        %v394 = vpop.f32.mrb[0].mxu0
        %395 = vdwg.mxu0
        %v396 = vmul.f32 %v343, 0.01
        %v397 = vmul.f32 %v346, 0.01
        %v398 = vmul.f32 %v351, 0.01
        %v399 = vmul.f32 %v354, 0.01
        %v400 = vmul.f32 %v359, 0.01
        %v401 = vmul.f32 %v362, 0.01
        %v402 = vmul.f32 %v367, 0.01
        %v403 = vmul.f32 %v370, 0.01
        %v404 = vmul.f32 %v375, 0.01
        %v405 = vmul.f32 %v378, 0.01
        %v406 = vmul.f32 %v383, 0.01
        %v407 = vmul.f32 %v386, 0.01
        %v408 = vmul.f32 %v391, 0.01
        %v409 = vmax.f32 %v343, %v396
        %v410 = vmax.f32 %v346, %v397
        %v411 = vmax.f32 %v351, %v398
        %v412 = vmax.f32 %v354, %v399
        %v413 = vmax.f32 %v359, %v400
        %v414 = vmax.f32 %v362, %v401
        %v415 = vmax.f32 %v367, %v402
        %v416 = vmax.f32 %v370, %v403
        %v417 = vmax.f32 %v375, %v404
        %v418 = vmax.f32 %v378, %v405
        %v419 = vmax.f32 %v383, %v406
        %v420 = vmax.f32 %v386, %v407
        %v421 = vmax.f32 %v391, %v408
        %v422 = vpack.c.bf16 %v410, %v409
        %v423 = vpack.c.bf16 %v412, %v411
        %v424 = vpack.c.bf16 %v414, %v413
        %v425 = vpack.c.bf16 %v416, %v415
        %v426 = vpack.c.bf16 %v418, %v417
        %v427 = vpack.c.bf16 %v420, %v419
        %v428 = vpack.c.bf16 %v421, %v421
        %v429 = vld [vmem:[%s3] sm:$0xf]
        %v430 = vld [vmem:[%s3 + $0x4] sm:$0xf]
        %v431 = vld [vmem:[%s3 + $0x8] sm:$0xf]
        %v432 = vld [vmem:[%s3 + $0xc] sm:$0xf]
        %v433 = vld [vmem:[%s3 + $0x10] sm:$0xf]
        %v434 = vld [vmem:[%s3 + $0x14] sm:$0xf]
        %v435 = vld [vmem:[%s3 + $0x18] sm:$0xf]
        %v436 = vld [vmem:[%s3 + $0x1c] sm:$0xf]
        %v437 = vld [vmem:[%s3 + $0x20] sm:$0xf]
        %v438 = vld [vmem:[%s3 + $0x24] sm:$0xf]
        %v439 = vld [vmem:[%s3 + $0x28] sm:$0xf]
        %v440 = vld [vmem:[%s3 + $0x2c] sm:$0xf]
        %v441 = vld [vmem:[%s3 + $0x30] sm:$0xf]
        %v442 = vld [vmem:[%s3 + $0x34] sm:$0xf]
        %v443 = vld [vmem:[%s3 + $0x38] sm:$0xf]
        %v444 = vld [vmem:[%s3 + $0x3c] sm:$0xf]
        %v445 = vld [vmem:[%s4] sm:$0x1]
        %v447 = vlaneseq
        %v448 = vshrl.u32 %v447, 7
        %v449 = vsub.s32 0, %v448
        %v450 = vrot.slane %v445, %v449
        %v468 = vunpack.c.l.b16 %v429
        %v469 = vunpack.c.l.b16 %v430
        %v470 = vunpack.c.l.b16 %v431
        %v471 = vunpack.c.l.b16 %v432
        %v472 = vunpack.c.l.b16 %v433
        %v473 = vunpack.c.l.b16 %v434
        %v474 = vunpack.c.l.b16 %v435
        %v475 = vunpack.c.l.b16 %v436
        %v476 = vunpack.c.l.b16 %v437
        %v477 = vunpack.c.l.b16 %v438
        %v478 = vunpack.c.l.b16 %v439
        %v479 = vunpack.c.l.b16 %v440
        %v480 = vunpack.c.l.b16 %v441
        %v481 = vunpack.c.l.b16 %v442
        %v482 = vunpack.c.l.b16 %v443
        %v483 = vunpack.c.l.b16 %v444
        %v484 = vpack.c.b16 %v469, %v468
        %v485 = vpack.c.b16 %v471, %v470
        %v486 = vpack.c.b16 %v473, %v472
        %v487 = vpack.c.b16 %v475, %v474
        %v488 = vpack.c.b16 %v477, %v476
        %v489 = vpack.c.b16 %v479, %v478
        %v490 = vpack.c.b16 %v481, %v480
        %v491 = vpack.c.b16 %v483, %v482
        %500 = vmatprep.subr.bf16.mxu0 0
        %501 = vmatpush1.bf16.msra.mxu0 %v484
        %502 = vmatprep.subr.bf16.mxu0 0
        %503 = vmatpush1.bf16.msra.mxu0 %v485
        %504 = vmatprep.subr.bf16.mxu0 0
        %505 = vmatpush1.bf16.msra.mxu0 %v486
        %506 = vmatprep.subr.bf16.mxu0 0
        %507 = vmatpush1.bf16.msra.mxu0 %v487
        %508 = vmatprep.subr.bf16.mxu0 0
        %509 = vmatpush1.bf16.msra.mxu0 %v488
        %510 = vmatprep.subr.bf16.mxu0 0
        %511 = vmatpush1.bf16.msra.mxu0 %v489
        %512 = vmatprep.subr.bf16.mxu0 0
        %513 = vmatpush1.bf16.msra.mxu0 %v490
        %514 = vmatprep.subr.bf16.mxu0 0
        %515 = vmatpush1.bf16.msra.mxu0 %v491
        %516 = vmatprep.subr.bf16.mxu0 0
        %517 = vmatpush1.bf16.msra.mxu0 0
        %518 = vmatprep.subr.bf16.mxu0 0
        %519 = vmatpush1.bf16.msra.mxu0 0
        %520 = vmatprep.subr.bf16.mxu0 0
        %521 = vmatpush1.bf16.msra.mxu0 0
        %522 = vmatprep.subr.bf16.mxu0 0
        %523 = vmatpush1.bf16.msra.mxu0 0
        %524 = vmatprep.subr.bf16.mxu0 0
        %525 = vmatpush1.bf16.msra.mxu0 0
        %526 = vmatprep.subr.bf16.mxu0 0
        %527 = vmatpush1.bf16.msra.mxu0 0
        %528 = vmatprep.subr.bf16.mxu0 0
        %529 = vmatpush1.bf16.msra.mxu0 0
        %530 = vmatprep.subr.bf16.mxu0 0
        %531 = vmatpush1.bf16.msra.mxu0 0
        %532 = vmatprep.mubr.bf16.mxu0 0
        %533 = vmatmul.mubr.bf16.gmra.mrb[0].mxu0 %v422
        %v534 = vpop.f32.mrb[0].mxu0
        %v535 = vadd.f32 %v450, %v534
        %v536 = vpop.f32.mrb[0].mxu0
        %v537 = vpop.f32.mrb[0].mxu0
        %v538 = vadd.f32 %v450, %v537
        %v539 = vpop.f32.mrb[0].mxu0
        %540 = vmatprep.mubr.bf16.mxu0 0
        %541 = vmatmul.mubr.bf16.gmra.mrb[0].mxu0 %v423
        %v542 = vpop.f32.mrb[0].mxu0
        %v543 = vadd.f32 %v450, %v542
        %v544 = vpop.f32.mrb[0].mxu0
        %v545 = vpop.f32.mrb[0].mxu0
        %v546 = vadd.f32 %v450, %v545
        %v547 = vpop.f32.mrb[0].mxu0
        %548 = vmatprep.mubr.bf16.mxu0 0
        %549 = vmatmul.mubr.bf16.gmra.mrb[0].mxu0 %v424
        %v550 = vpop.f32.mrb[0].mxu0
        %v551 = vadd.f32 %v450, %v550
        %v552 = vpop.f32.mrb[0].mxu0
        %v553 = vpop.f32.mrb[0].mxu0
        %v554 = vadd.f32 %v450, %v553
        %v555 = vpop.f32.mrb[0].mxu0
        %556 = vmatprep.mubr.bf16.mxu0 0
        %557 = vmatmul.mubr.bf16.gmra.mrb[0].mxu0 %v425
        %v558 = vpop.f32.mrb[0].mxu0
        %v559 = vadd.f32 %v450, %v558
        %v560 = vpop.f32.mrb[0].mxu0
        %v561 = vpop.f32.mrb[0].mxu0
        %v562 = vadd.f32 %v450, %v561
        %v563 = vpop.f32.mrb[0].mxu0
        %564 = vmatprep.mubr.bf16.mxu0 0
        %565 = vmatmul.mubr.bf16.gmra.mrb[0].mxu0 %v426
        %v566 = vpop.f32.mrb[0].mxu0
        %v567 = vadd.f32 %v450, %v566
        %v568 = vpop.f32.mrb[0].mxu0
        %v569 = vpop.f32.mrb[0].mxu0
        %v570 = vadd.f32 %v450, %v569
        %v571 = vpop.f32.mrb[0].mxu0
        %572 = vmatprep.mubr.bf16.mxu0 0
        %573 = vmatmul.mubr.bf16.gmra.mrb[0].mxu0 %v427
        %v574 = vpop.f32.mrb[0].mxu0
        %v575 = vadd.f32 %v450, %v574
        %v576 = vpop.f32.mrb[0].mxu0
        %v577 = vpop.f32.mrb[0].mxu0
        %v578 = vadd.f32 %v450, %v577
        %v579 = vpop.f32.mrb[0].mxu0
        %580 = vmatprep.mubr.bf16.mxu0 0
        %581 = vmatmul.mubr.bf16.gmra.mrb[0].mxu0 %v428
        %v582 = vpop.f32.mrb[0].mxu0
        %v583 = vadd.f32 %v450, %v582
        %v584 = vpop.f32.mrb[0].mxu0
        %v585 = vpop.f32.mrb[0].mxu0
        %v586 = vpop.f32.mrb[0].mxu0
        %587 = vdwg.mxu0
        %588 = vst [vmem:[%s230] sm:$0xff] %v535
        %589 = vst [vmem:[%s230 + $0x8] sm:$0xff] %v538
        %590 = vst [vmem:[%s230 + $0x10] sm:$0xff] %v543
        %591 = vst [vmem:[%s230 + $0x18] sm:$0xff] %v546
        %592 = vst [vmem:[%s230 + $0x20] sm:$0xff] %v551
        %593 = vst [vmem:[%s230 + $0x28] sm:$0xff] %v554
        %594 = vst [vmem:[%s230 + $0x30] sm:$0xff] %v559
        %595 = vst [vmem:[%s230 + $0x38] sm:$0xff] %v562
        %596 = vst [vmem:[%s230 + $0x40] sm:$0xff] %v567
        %597 = vst [vmem:[%s230 + $0x48] sm:$0xff] %v570
        %598 = vst [vmem:[%s230 + $0x50] sm:$0xff] %v575
        %599 = vst [vmem:[%s230 + $0x58] sm:$0xff] %v578
        %600 = vst [vmem:[%s230 + $0x60] sm:$0xff] %v583
        %s601 = sand.u32 %s137, 1
        %s602 = scalar_lea.sflag [#allocation3], %s601
        %s603 = sand.u32 %s137, 1
        %s604 = smul.addr %s603, 104
        %s605 = scalar_lea.vmem [#allocation2], %s604
        // Predicated region
        $region41: #{tpu_custom_call.1} parent=39 // pred_check
          %p606 = pneg %p147
        $region42: #{tpu_custom_call.1} parent=39 // pred_check_branch
          %608 = sbr.rel (%p606) target = $region44
        $region43: #{tpu_custom_call.1} parent=39 // pred_region
          %s609 = smul.u32 13, %s19
          %s610 = ssub.s32 25, %s609
          %p611 = scmp.lt.s32.totalorder %s610, 13
          %s612 = scalar_select %p611, %s610, 13
          %s613 = smul.u32 128, %s612
          %s615 = ssub.s32 1664, %s613
          %616 = vsyncadd %s602, %s615
          %p617 = scmp.ne.s32.totalorder 0, %s613
          %s618 = smul.addr %s609, 128
          %s619 = scalar_lea.hbm %s5, %s618
          %s620 = smul.u32 8, %s612
          %s621 = sshll.u32 %s605, 4
          %s622 = int_to_ptr.vmem [resolvable:$true] %s621
          %s623 = sshll.u32 %s620, 4
          %627 = dma.vmem_to_hbm [thread:$0]  (%p617), %s622, %s623, %s619, %s602, 128, 128, 8
        $region44: #{tpu_custom_call.1} parent=39 // pred_fallthru
          _
      $region40: #{tpu_custom_call.1} parent=5 // pred_fallthru
        _
      %p628 = scmp.le.s32.totalorder 2, %s14
      // Predicated region
      $region45: #{tpu_custom_call.1} parent=5 // pred_check
        %p629 = pneg %p628
      $region46: #{tpu_custom_call.1} parent=5 // pred_check_branch
        %631 = sbr.rel (%p629) target = $region48
      $region47: #{tpu_custom_call.1} parent=5 // pred_region
        %s632 = ssub.s32 %s14, 2
        // Predicated region
        $region49: #{tpu_custom_call.1} parent=47 // pred_check
          %p633 = pneg %p153
        $region50: #{tpu_custom_call.1} parent=47 // pred_check_branch
          %635 = sbr.rel (%p633) target = $region52
        $region51: #{tpu_custom_call.1} parent=47 // pred_region
          %s636 = sand.u32 %s138, 1
          %s637 = scalar_lea.sflag [#allocation3], %s636
          %s638 = sand.u32 %s138, 1
          %s639 = smul.addr %s638, 104
          %s640 = scalar_lea.vmem [#allocation2], %s639
          %641 = dma.done %s637, 1664
        $region52: #{tpu_custom_call.1} parent=47 // pred_fallthru
          _
      $region48: #{tpu_custom_call.1} parent=5 // pred_fallthru
        _
    $region6: #{tpu_custom_call.1} parent=1 // loop_footer
      %s18 = sadd.s32 1, %s14
    $region7: #{tpu_custom_call.1} parent=1 // loop_footer_branch
      %13 = sbr.rel target = $region3
    $region8: #{tpu_custom_call.1} parent=1 // loop_exit
      _
    %642 = vsyncpa [#allocation3], 1
    %s643 = scalar_lea.sflag [#allocation3], 1
    %644 = vsyncpa %s643, 1

</llo_original>
